<compile_context>
chip_gen: v5e
topology: v5e:2x2
jax: 0.10.0
libtpu: 0.0.40
codegen_flags: <defaults>
</compile_context>

<pallas_src>
import jax
import jax.numpy as jnp
from jax.experimental import pallas as pl
from jax.experimental.pallas import tpu as pltpu


def _leaky_relu(h, negative_slope=0.01):
    # matches torch.nn.LeakyReLU default slope
    return jnp.where(h > 0, h, negative_slope * h)


def classifier_kernel(x_ref,
                      w1_ref, b1_ref,
                      w2_ref, b2_ref,
                      w3_ref, b3_ref,
                      w4_ref, b4_ref,
                      w5_ref, b5_ref,
                      o_ref):
    """Fused 5-layer MLP, batch-on-lanes.

    x_ref : [tb, D]        (bf16)  batch tile of the input
    w_i   : [out_i, in_i]  (bf16)  torch layout, fully VMEM-resident
    b_i   : [out_i, 1]     (f32)
    o_ref : [1, tb]        (f32)   logits with batch on lanes (lane-dense)
    """
    x = x_ref[...]                                       # [tb, D] bf16

    # Layer 1: contract the feature axis of both operands (A @ B^T, the
    # standard q@k^T MXU pattern) -> activations [D, tb] with batch on lanes.
    h = jax.lax.dot_general(
        w1_ref[...], x,
        dimension_numbers=(((1,), (1,)), ((), ())),
        preferred_element_type=jnp.float32)
    h = _leaky_relu(h + b1_ref[...])

    h = jnp.dot(w2_ref[...], h.astype(jnp.bfloat16),
                preferred_element_type=jnp.float32)
    h = _leaky_relu(h + b2_ref[...])

    h = jnp.dot(w3_ref[...], h.astype(jnp.bfloat16),
                preferred_element_type=jnp.float32)
    h = _leaky_relu(h + b3_ref[...])

    h = jnp.dot(w4_ref[...], h.astype(jnp.bfloat16),
                preferred_element_type=jnp.float32)
    h = _leaky_relu(h + b4_ref[...])

    out = jnp.dot(w5_ref[...], h.astype(jnp.bfloat16),
                  preferred_element_type=jnp.float32)
    o_ref[...] = (out + b5_ref[...]).astype(o_ref.dtype)


def _pick_batch_tile(B, tb):
    """Batch tile: large + multiple of 128 for MXU/lane density, clamped for
    tiny batches so the (8,128)/full-dim BlockSpec constraint always holds."""
    if B <= 128:
        return B                       # one (possibly ragged) tile == full dim
    if B < 256:
        return 128
    tb = max(128, min(tb, 512))
    return (tb // 128) * 128


def classifier_forward(x, params, *, tb=256):
    """Runs the Classifier MLP; returns shape [B] (== .reshape(x.shape[0]))."""
    B, D = x.shape
    (w1, b1), (w2, b2), (w3, b3), (w4, b4), (w5, b5) = params
    num_labels = w5.shape[0]
    assert num_labels == 1, \
        "reshape(x.shape[0]) in the torch forward implies num_labels == 1"
    assert w1.shape == (D, D)

    tb = _pick_batch_tile(B, tb)       # use tb=128 on v5e (4x128^2 MXU)
    grid = (pl.cdiv(B, tb),)           # >=2 steps for large B -> both v7x TCs

    # Grid-invariant operands: one resident VMEM copy, no double buffering.
    resident = pl.BlockSpec(memory_space=pltpu.MemorySpace.VMEM)

    out = pl.pallas_call(
        classifier_kernel,
        out_shape=jax.ShapeDtypeStruct((num_labels, B), jnp.float32),
        grid_spec=pltpu.PrefetchScalarGridSpec(
            num_scalar_prefetch=0,
            grid=grid,
            in_specs=[
                pl.BlockSpec((tb, D), lambda i: (i, 0)),   # x batch tile
                resident, resident,                        # w1, b1
                resident, resident,                        # w2, b2
                resident, resident,                        # w3, b3
                resident, resident,                        # w4, b4
                resident, resident,                        # w5, b5
            ],
            # batch on the lane axis -> lane-dense output stores
            out_specs=pl.BlockSpec((num_labels, tb), lambda i: (0, i)),
        ),
        compiler_params=pltpu.CompilerParams(
            dimension_semantics=("parallel",),   # megacore-shard the batch grid
            vmem_limit_bytes=48 * 1024 * 1024,   # > 16/32 MiB defaults, < v7x 64 MiB
        ),
    )(x.astype(jnp.bfloat16),
      w1, b1, w2, b2, w3, b3, w4, b4, w5, b5)

    # torch: self.classifier(x).reshape(x.shape[0])
    return out.reshape(B)


def init_params(key, embed_dim, num_labels):
    """Deterministic synthetic init.

    Weights use the torch-native [out_features, in_features] layout, stored in
    bf16 (MXU operands); biases are [out_features, 1] in f32.
    """
    dims = [(embed_dim, embed_dim),
            (embed_dim, embed_dim * 3),
            (embed_dim * 3, embed_dim),
            (embed_dim, embed_dim),
            (embed_dim, num_labels)]
    params = []
    for (d_in, d_out) in dims:
        key, kw, kb = jax.random.split(key, 3)
        bound = float(1.0 / (d_in ** 0.5))  # mimic torch Linear default init
        w = jax.random.uniform(kw, (d_out, d_in), jnp.float32,
                               -bound, bound).astype(jnp.bfloat16)
        b = jax.random.uniform(kb, (d_out, 1), jnp.float32, -bound, bound)
        params.append((w, b))
    return params


def classifier_reference(x, params):
    """Pure-JAX reference mirroring the kernel's bf16-operand / f32-accumulate
    numerics (row-major layout)."""
    n = len(params)
    h = x.astype(jnp.bfloat16).astype(jnp.float32)
    for i, (w, b) in enumerate(params):
        h = h @ w.astype(jnp.float32).T + b.reshape(1, -1)
        if i < n - 1:
            h = _leaky_relu(h)
            h = h.astype(jnp.bfloat16).astype(jnp.float32)
    return h.reshape(x.shape[0])


if __name__ == "__main__":
    embed_dim = 32
    num_labels = 1
    batch = 8

    key = jax.random.PRNGKey(0)
    key, kx = jax.random.split(key)
    x = jax.random.normal(kx, (batch, embed_dim), dtype=jnp.float32)
    params = init_params(key, embed_dim, num_labels)

    out = classifier_forward(x, params)
    out = jax.block_until_ready(out)

    ref = classifier_reference(x, params)
    assert out.shape == (batch,)
    assert jnp.allclose(out, ref, atol=2e-2, rtol=2e-2), (out, ref)

    print("KERNEL_OK")
</pallas_src>

<mosaic_0001>
module attributes {stable_mosaic.version = 11 : i64} {
  func.func @classifier_kernel(%arg0: i32, %arg1: memref<8x32xbf16, #tpu.memory_space<vmem>>, %arg2: memref<32x32xbf16, #tpu.memory_space<vmem>>, %arg3: memref<32x1xf32, #tpu.memory_space<vmem>>, %arg4: memref<96x32xbf16, #tpu.memory_space<vmem>>, %arg5: memref<96x1xf32, #tpu.memory_space<vmem>>, %arg6: memref<32x96xbf16, #tpu.memory_space<vmem>>, %arg7: memref<32x1xf32, #tpu.memory_space<vmem>>, %arg8: memref<32x32xbf16, #tpu.memory_space<vmem>>, %arg9: memref<32x1xf32, #tpu.memory_space<vmem>>, %arg10: memref<1x32xbf16, #tpu.memory_space<vmem>>, %arg11: memref<1x1xf32, #tpu.memory_space<vmem>>, %arg12: memref<1x8xf32, #tpu.memory_space<vmem>>) attributes {dimension_semantics = [#tpu.dimension_semantics<parallel>], iteration_bounds = array<i64: 1>, scalar_prefetch = 0 : i64, scratch_operands = 0 : i64, tpu.core_type = #tpu.core_type<tc>, window_params = [{transform_indices = @transform_0, window_bounds = array<i64: 8, 32>}, {pipeline_mode = #tpu.pipeline_mode<synchronous>, transform_indices = @transform_1, window_bounds = array<i64: 32, 32>}, {pipeline_mode = #tpu.pipeline_mode<synchronous>, transform_indices = @transform_2, window_bounds = array<i64: 32, 1>}, {pipeline_mode = #tpu.pipeline_mode<synchronous>, transform_indices = @transform_3, window_bounds = array<i64: 96, 32>}, {pipeline_mode = #tpu.pipeline_mode<synchronous>, transform_indices = @transform_4, window_bounds = array<i64: 96, 1>}, {pipeline_mode = #tpu.pipeline_mode<synchronous>, transform_indices = @transform_5, window_bounds = array<i64: 32, 96>}, {pipeline_mode = #tpu.pipeline_mode<synchronous>, transform_indices = @transform_6, window_bounds = array<i64: 32, 1>}, {pipeline_mode = #tpu.pipeline_mode<synchronous>, transform_indices = @transform_7, window_bounds = array<i64: 32, 32>}, {pipeline_mode = #tpu.pipeline_mode<synchronous>, transform_indices = @transform_8, window_bounds = array<i64: 32, 1>}, {pipeline_mode = #tpu.pipeline_mode<synchronous>, transform_indices = @transform_9, window_bounds = array<i64: 1, 32>}, {pipeline_mode = #tpu.pipeline_mode<synchronous>, transform_indices = @transform_10, window_bounds = array<i64: 1, 1>}, {transform_indices = @transform_11, window_bounds = array<i64: 1, 8>}]} {
    %c0 = arith.constant 0 : index
    %c0_0 = arith.constant 0 : index
    %0 = vector.load %arg1[%c0, %c0_0] : memref<8x32xbf16, #tpu.memory_space<vmem>>, vector<8x32xbf16>
    %c0_1 = arith.constant 0 : index
    %c0_2 = arith.constant 0 : index
    %1 = vector.load %arg2[%c0_1, %c0_2] : memref<32x32xbf16, #tpu.memory_space<vmem>>, vector<32x32xbf16>
    %cst = arith.constant dense<0.000000e+00> : vector<32x8xf32>
    %2 = tpu.matmul %1, %0, %cst {dimension_numbers = #tpu.dot_dimension_numbers<[1], [1], [0], [0], [0, 0, 1, 0], [], []>} : vector<32x32xbf16>, vector<8x32xbf16>, vector<32x8xf32> -> vector<32x8xf32>
    %c0_3 = arith.constant 0 : index
    %c0_4 = arith.constant 0 : index
    %3 = vector.load %arg3[%c0_3, %c0_4] : memref<32x1xf32, #tpu.memory_space<vmem>>, vector<32x1xf32>
    %4 = vector.broadcast %3 : vector<32x1xf32> to vector<32x8xf32>
    %5 = arith.addf %2, %4 : vector<32x8xf32>
    %cst_5 = arith.constant 0.000000e+00 : f32
    %6 = vector.broadcast %cst_5 : f32 to vector<32x8xf32>
    %7 = arith.cmpf ogt, %5, %6 : vector<32x8xf32>
    %cst_6 = arith.constant 0.00999999977 : f32
    %8 = vector.broadcast %cst_6 : f32 to vector<32x8xf32>
    %9 = arith.mulf %8, %5 : vector<32x8xf32>
    %10 = arith.select %7, %5, %9 : vector<32x8xi1>, vector<32x8xf32>
    %c0_7 = arith.constant 0 : index
    %c0_8 = arith.constant 0 : index
    %11 = vector.load %arg4[%c0_7, %c0_8] : memref<96x32xbf16, #tpu.memory_space<vmem>>, vector<96x32xbf16>
    %12 = arith.truncf %10 : vector<32x8xf32> to vector<32x8xbf16>
    %cst_9 = arith.constant dense<0.000000e+00> : vector<96x8xf32>
    %13 = tpu.matmul %11, %12, %cst_9 {dimension_numbers = #tpu.dot_dimension_numbers<[1], [0], [0], [1], [0, 0, 1, 1], [], []>} : vector<96x32xbf16>, vector<32x8xbf16>, vector<96x8xf32> -> vector<96x8xf32>
    %c0_10 = arith.constant 0 : index
    %c0_11 = arith.constant 0 : index
    %14 = vector.load %arg5[%c0_10, %c0_11] : memref<96x1xf32, #tpu.memory_space<vmem>>, vector<96x1xf32>
    %15 = vector.broadcast %14 : vector<96x1xf32> to vector<96x8xf32>
    %16 = arith.addf %13, %15 : vector<96x8xf32>
    %cst_12 = arith.constant 0.000000e+00 : f32
    %17 = vector.broadcast %cst_12 : f32 to vector<96x8xf32>
    %18 = arith.cmpf ogt, %16, %17 : vector<96x8xf32>
    %cst_13 = arith.constant 0.00999999977 : f32
    %19 = vector.broadcast %cst_13 : f32 to vector<96x8xf32>
    %20 = arith.mulf %19, %16 : vector<96x8xf32>
    %21 = arith.select %18, %16, %20 : vector<96x8xi1>, vector<96x8xf32>
    %c0_14 = arith.constant 0 : index
    %c0_15 = arith.constant 0 : index
    %22 = vector.load %arg6[%c0_14, %c0_15] : memref<32x96xbf16, #tpu.memory_space<vmem>>, vector<32x96xbf16>
    %23 = arith.truncf %21 : vector<96x8xf32> to vector<96x8xbf16>
    %cst_16 = arith.constant dense<0.000000e+00> : vector<32x8xf32>
    %24 = tpu.matmul %22, %23, %cst_16 {dimension_numbers = #tpu.dot_dimension_numbers<[1], [0], [0], [1], [0, 0, 1, 1], [], []>} : vector<32x96xbf16>, vector<96x8xbf16>, vector<32x8xf32> -> vector<32x8xf32>
    %c0_17 = arith.constant 0 : index
    %c0_18 = arith.constant 0 : index
    %25 = vector.load %arg7[%c0_17, %c0_18] : memref<32x1xf32, #tpu.memory_space<vmem>>, vector<32x1xf32>
    %26 = vector.broadcast %25 : vector<32x1xf32> to vector<32x8xf32>
    %27 = arith.addf %24, %26 : vector<32x8xf32>
    %cst_19 = arith.constant 0.000000e+00 : f32
    %28 = vector.broadcast %cst_19 : f32 to vector<32x8xf32>
    %29 = arith.cmpf ogt, %27, %28 : vector<32x8xf32>
    %cst_20 = arith.constant 0.00999999977 : f32
    %30 = vector.broadcast %cst_20 : f32 to vector<32x8xf32>
    %31 = arith.mulf %30, %27 : vector<32x8xf32>
    %32 = arith.select %29, %27, %31 : vector<32x8xi1>, vector<32x8xf32>
    %c0_21 = arith.constant 0 : index
    %c0_22 = arith.constant 0 : index
    %33 = vector.load %arg8[%c0_21, %c0_22] : memref<32x32xbf16, #tpu.memory_space<vmem>>, vector<32x32xbf16>
    %34 = arith.truncf %32 : vector<32x8xf32> to vector<32x8xbf16>
    %cst_23 = arith.constant dense<0.000000e+00> : vector<32x8xf32>
    %35 = tpu.matmul %33, %34, %cst_23 {dimension_numbers = #tpu.dot_dimension_numbers<[1], [0], [0], [1], [0, 0, 1, 1], [], []>} : vector<32x32xbf16>, vector<32x8xbf16>, vector<32x8xf32> -> vector<32x8xf32>
    %c0_24 = arith.constant 0 : index
    %c0_25 = arith.constant 0 : index
    %36 = vector.load %arg9[%c0_24, %c0_25] : memref<32x1xf32, #tpu.memory_space<vmem>>, vector<32x1xf32>
    %37 = vector.broadcast %36 : vector<32x1xf32> to vector<32x8xf32>
    %38 = arith.addf %35, %37 : vector<32x8xf32>
    %cst_26 = arith.constant 0.000000e+00 : f32
    %39 = vector.broadcast %cst_26 : f32 to vector<32x8xf32>
    %40 = arith.cmpf ogt, %38, %39 : vector<32x8xf32>
    %cst_27 = arith.constant 0.00999999977 : f32
    %41 = vector.broadcast %cst_27 : f32 to vector<32x8xf32>
    %42 = arith.mulf %41, %38 : vector<32x8xf32>
    %43 = arith.select %40, %38, %42 : vector<32x8xi1>, vector<32x8xf32>
    %c0_28 = arith.constant 0 : index
    %c0_29 = arith.constant 0 : index
    %44 = vector.load %arg10[%c0_28, %c0_29] : memref<1x32xbf16, #tpu.memory_space<vmem>>, vector<1x32xbf16>
    %45 = arith.truncf %43 : vector<32x8xf32> to vector<32x8xbf16>
    %cst_30 = arith.constant dense<0.000000e+00> : vector<1x8xf32>
    %46 = tpu.matmul %44, %45, %cst_30 {dimension_numbers = #tpu.dot_dimension_numbers<[1], [0], [0], [1], [0, 0, 1, 1], [], []>} : vector<1x32xbf16>, vector<32x8xbf16>, vector<1x8xf32> -> vector<1x8xf32>
    %c0_31 = arith.constant 0 : index
    %c0_32 = arith.constant 0 : index
    %47 = vector.load %arg11[%c0_31, %c0_32] : memref<1x1xf32, #tpu.memory_space<vmem>>, vector<1x1xf32>
    %48 = vector.broadcast %47 : vector<1x1xf32> to vector<1x8xf32>
    %49 = arith.addf %46, %48 : vector<1x8xf32>
    %c0_33 = arith.constant 0 : index
    %c0_34 = arith.constant 0 : index
    %50 = vector.load %arg12[%c0_33, %c0_34] : memref<1x8xf32, #tpu.memory_space<vmem>>, vector<1x8xf32>
    tpu.vector_store %arg12[%c0_33, %c0_34], %49 {strides = array<i32>} : memref<1x8xf32, #tpu.memory_space<vmem>>, vector<1x8xf32>,
    return
  }
  func.func @transform_0(%arg0: i32) -> (i32, i32) {
    %c0_i32 = arith.constant 0 : i32
    %c0_i32_0 = arith.constant 0 : i32
    return %arg0, %c0_i32 : i32, i32
  }
  func.func @transform_1(%arg0: i32) -> (i32, i32) {
    %c0_i32 = arith.constant 0 : i32
    %c0_i32_0 = arith.constant 0 : i32
    %c0_i32_1 = arith.constant 0 : i32
    return %c0_i32, %c0_i32_0 : i32, i32
  }
  func.func @transform_2(%arg0: i32) -> (i32, i32) {
    %c0_i32 = arith.constant 0 : i32
    %c0_i32_0 = arith.constant 0 : i32
    %c0_i32_1 = arith.constant 0 : i32
    return %c0_i32, %c0_i32_0 : i32, i32
  }
  func.func @transform_3(%arg0: i32) -> (i32, i32) {
    %c0_i32 = arith.constant 0 : i32
    %c0_i32_0 = arith.constant 0 : i32
    %c0_i32_1 = arith.constant 0 : i32
    return %c0_i32, %c0_i32_0 : i32, i32
  }
  func.func @transform_4(%arg0: i32) -> (i32, i32) {
    %c0_i32 = arith.constant 0 : i32
    %c0_i32_0 = arith.constant 0 : i32
    %c0_i32_1 = arith.constant 0 : i32
    return %c0_i32, %c0_i32_0 : i32, i32
  }
  func.func @transform_5(%arg0: i32) -> (i32, i32) {
    %c0_i32 = arith.constant 0 : i32
    %c0_i32_0 = arith.constant 0 : i32
    %c0_i32_1 = arith.constant 0 : i32
    return %c0_i32, %c0_i32_0 : i32, i32
  }
  func.func @transform_6(%arg0: i32) -> (i32, i32) {
    %c0_i32 = arith.constant 0 : i32
    %c0_i32_0 = arith.constant 0 : i32
    %c0_i32_1 = arith.constant 0 : i32
    return %c0_i32, %c0_i32_0 : i32, i32
  }
  func.func @transform_7(%arg0: i32) -> (i32, i32) {
    %c0_i32 = arith.constant 0 : i32
    %c0_i32_0 = arith.constant 0 : i32
    %c0_i32_1 = arith.constant 0 : i32
    return %c0_i32, %c0_i32_0 : i32, i32
  }
  func.func @transform_8(%arg0: i32) -> (i32, i32) {
    %c0_i32 = arith.constant 0 : i32
    %c0_i32_0 = arith.constant 0 : i32
    %c0_i32_1 = arith.constant 0 : i32
    return %c0_i32, %c0_i32_0 : i32, i32
  }
  func.func @transform_9(%arg0: i32) -> (i32, i32) {
    %c0_i32 = arith.constant 0 : i32
    %c0_i32_0 = arith.constant 0 : i32
    %c0_i32_1 = arith.constant 0 : i32
    return %c0_i32, %c0_i32_0 : i32, i32
  }
  func.func @transform_10(%arg0: i32) -> (i32, i32) {
    %c0_i32 = arith.constant 0 : i32
    %c0_i32_0 = arith.constant 0 : i32
    %c0_i32_1 = arith.constant 0 : i32
    return %c0_i32, %c0_i32_0 : i32, i32
  }
  func.func @transform_11(%arg0: i32) -> (i32, i32) {
    %c0_i32 = arith.constant 0 : i32
    %c0_i32_0 = arith.constant 0 : i32
    return %c0_i32, %arg0 : i32, i32
  }
}

</mosaic_0001>

<llo_original>
// kernel: tpu_custom_call.1
$region0: #{tpu_custom_call.1}
  #allocation0 [shape = 'u32[]', space=smem, size = 0x4, offset = 0x4, fixed_abs, tag = 'smem constant byte address 0x4 - core index']
  #allocation1 [shape = 'u32[72,128]{1,0:T(1,128)}', space=vmem, size = 0x9000, scoped, tag = 'internal scratch']
  #allocation2 [shape = 'f32[1,1]{1,0:T(1,128)S(1)}', space=vmem, size = 0x200, scoped, tag = 'scoped memory for tpu_custom_call.1']
  %s0 = inlined_call_operand.vmem [shape: bf16[8,32], index: 0, kind: input, shape index: {}]
  %s1 = inlined_call_operand.vmem [shape: bf16[32,32], index: 1, kind: input, shape index: {}]
  %s2 = inlined_call_operand.vmem [shape: f32[32,1], index: 2, kind: input, shape index: {}]
  %s3 = inlined_call_operand.vmem [shape: bf16[96,32], index: 3, kind: input, shape index: {}]
  %s4 = inlined_call_operand.vmem [shape: f32[96,1], index: 4, kind: input, shape index: {}]
  %s5 = inlined_call_operand.vmem [shape: bf16[32,96], index: 5, kind: input, shape index: {}]
  %s6 = inlined_call_operand.vmem [shape: f32[32,1], index: 6, kind: input, shape index: {}]
  %s7 = inlined_call_operand.vmem [shape: bf16[32,32], index: 7, kind: input, shape index: {}]
  %s8 = inlined_call_operand.vmem [shape: f32[32,1], index: 8, kind: input, shape index: {}]
  %s9 = inlined_call_operand.vmem [shape: bf16[1,32], index: 9, kind: input, shape index: {}]
  %s10 = inlined_call_operand.<no memory space> [shape: f32[1,1], index: 10, kind: input, shape index: {}]
  %s11 = inlined_call_operand.hbm [shape: f32[1,8], index: 11, kind: output, shape index: {}]
  %s12 = sld [smem:[#allocation0]]
  $region54: #{tpu_custom_call.1} parent=0
    _
  %s14 = ssub.s32 1, %s12
  %s15 = scalar_select 0, %s14, %s12
  %v16 = vstv %s10
  %17 = vst [vmem:[#allocation2] sm:$0x1] %v16
  $region1: #{tpu_custom_call.1} parent=0
    #allocation3 [shape = 'u8[512]{0}', space=vmem, size = 0x400, scoped, tag = 'output window, operand 0, single buffered']
    #allocation4 [shape = 's32[1]{0}', space=sflag, size = 0x4, scoped, tag = 'scoped memory for tpu_custom_call.1']
    %18 = vsyncpa [#allocation4], 0
    // Predicated region
    $region2: #{tpu_custom_call.1} parent=1 // pred_check
      _
    $region3: #{tpu_custom_call.1} parent=1 // pred_check_branch
      %20 = sbr.rel (0) target = $region5
    $region4: #{tpu_custom_call.1} parent=1 // pred_region
      _
    $region5: #{tpu_custom_call.1} parent=1 // pred_fallthru
      _
    // Predicated region
    $region6: #{tpu_custom_call.1} parent=1 // pred_check
      _
    $region7: #{tpu_custom_call.1} parent=1 // pred_check_branch
      %22 = sbr.rel (0) target = $region9
    $region8: #{tpu_custom_call.1} parent=1 // pred_region
      _
    $region9: #{tpu_custom_call.1} parent=1 // pred_fallthru
      _
    // Predicated region
    $region10: #{tpu_custom_call.1} parent=1 // pred_check
      _
    $region11: #{tpu_custom_call.1} parent=1 // pred_check_branch
      %24 = sbr.rel (0) target = $region13
    $region12: #{tpu_custom_call.1} parent=1 // pred_region
      _
    $region13: #{tpu_custom_call.1} parent=1 // pred_fallthru
      _
    // Predicated region
    $region14: #{tpu_custom_call.1} parent=1 // pred_check
      _
    $region15: #{tpu_custom_call.1} parent=1 // pred_check_branch
      %26 = sbr.rel (0) target = $region17
    $region16: #{tpu_custom_call.1} parent=1 // pred_region
      _
    $region17: #{tpu_custom_call.1} parent=1 // pred_fallthru
      _
    // Predicated region
    $region18: #{tpu_custom_call.1} parent=1 // pred_check
      _
    $region19: #{tpu_custom_call.1} parent=1 // pred_check_branch
      %28 = sbr.rel (0) target = $region21
    $region20: #{tpu_custom_call.1} parent=1 // pred_region
      _
    $region21: #{tpu_custom_call.1} parent=1 // pred_fallthru
      _
    // Predicated region
    $region22: #{tpu_custom_call.1} parent=1 // pred_check
      _
    $region23: #{tpu_custom_call.1} parent=1 // pred_check_branch
      %30 = sbr.rel (0) target = $region25
    $region24: #{tpu_custom_call.1} parent=1 // pred_region
      _
    $region25: #{tpu_custom_call.1} parent=1 // pred_fallthru
      _
    // Predicated region
    $region26: #{tpu_custom_call.1} parent=1 // pred_check
      _
    $region27: #{tpu_custom_call.1} parent=1 // pred_check_branch
      %32 = sbr.rel (0) target = $region29
    $region28: #{tpu_custom_call.1} parent=1 // pred_region
      _
    $region29: #{tpu_custom_call.1} parent=1 // pred_fallthru
      _
    // Predicated region
    $region30: #{tpu_custom_call.1} parent=1 // pred_check
      _
    $region31: #{tpu_custom_call.1} parent=1 // pred_check_branch
      %34 = sbr.rel (0) target = $region33
    $region32: #{tpu_custom_call.1} parent=1 // pred_region
      _
    $region33: #{tpu_custom_call.1} parent=1 // pred_fallthru
      _
    // Predicated region
    $region34: #{tpu_custom_call.1} parent=1 // pred_check
      _
    $region35: #{tpu_custom_call.1} parent=1 // pred_check_branch
      %36 = sbr.rel (0) target = $region37
    $region36: #{tpu_custom_call.1} parent=1 // pred_region
      _
    $region37: #{tpu_custom_call.1} parent=1 // pred_fallthru
      _
    // Predicated region
    $region38: #{tpu_custom_call.1} parent=1 // pred_check
      _
    $region39: #{tpu_custom_call.1} parent=1 // pred_check_branch
      %38 = sbr.rel (0) target = $region41
    $region40: #{tpu_custom_call.1} parent=1 // pred_region
      _
    $region41: #{tpu_custom_call.1} parent=1 // pred_fallthru
      _
    // Predicated region
    $region42: #{tpu_custom_call.1} parent=1 // pred_check
      _
    $region43: #{tpu_custom_call.1} parent=1 // pred_check_branch
      %40 = sbr.rel (0) target = $region45
    $region44: #{tpu_custom_call.1} parent=1 // pred_region
      _
    $region45: #{tpu_custom_call.1} parent=1 // pred_fallthru
      _
    %v42 = vld [vmem:[%s0] sm:$0xf]
    %v43 = vld [vmem:[%s1] sm:$0xf]
    %v44 = vld [vmem:[%s1 + $0x4] sm:$0xf]
    %v45 = vld [vmem:[%s1 + $0x8] sm:$0xf]
    %v46 = vld [vmem:[%s1 + $0xc] sm:$0xf]
    %v47 = vld [vmem:[%s2] sm:$0xff]
    %v48 = vld [vmem:[%s2 + $0x8] sm:$0xff]
    %v49 = vld [vmem:[%s2 + $0x10] sm:$0xff]
    %v50 = vld [vmem:[%s2 + $0x18] sm:$0xff]
    %52 = vset.pattern.permute.xlu0 0
    %53 = vperm.xlu0 %52, %v47
    %v54 = vpop.permute.xlu0 %53
    %57 = vset.pattern.permute.xlu0 0
    %58 = vperm.xlu0 %57, %v48
    %v59 = vpop.permute.xlu0 %58
    %62 = vset.pattern.permute.xlu0 0
    %63 = vperm.xlu0 %62, %v49
    %v64 = vpop.permute.xlu0 %63
    %67 = vset.pattern.permute.xlu0 0
    %68 = vperm.xlu0 %67, %v50
    %v69 = vpop.permute.xlu0 %68
    %v75 = vunpack.c.l.b16 %v43
    %v76 = vunpack.c.l.b16 %v44
    %v77 = vunpack.c.l.b16 %v45
    %v78 = vunpack.c.l.b16 %v46
    %v79 = vpack.c.b16 %v76, %v75
    %v80 = vpack.c.b16 %v78, %v77
    %vm81 = vcmask 261120
    %v83 = vsel %vm81, %v79, 0
    %v86 = vsel %vm81, %v80, 0
    %v89 = vsel %vm81, %v42, 0
    %91 = vmatpush.bf16.xpose.msra.mxu0 0
    %92 = vmatpush.bf16.xpose.msra.mxu0 0
    %93 = vmatpush.bf16.xpose.msra.mxu0 0
    %94 = vmatpush.bf16.xpose.msra.mxu0 0
    %95 = vmatpush.bf16.xpose.msra.mxu0 0
    %96 = vmatpush.bf16.xpose.msra.mxu0 0
    %97 = vmatpush.bf16.xpose.msra.mxu0 0
    %98 = vmatpush.bf16.xpose.msra.mxu0 %v89
    %99 = vmatmul.bf16.gmra.mxu0 %v83
    %v100 = vpop.f32.mrf.mxu0
    %v101 = vadd.f32 %v54, %v100
    %v102 = vpop.f32.mrf.mxu0
    %v103 = vadd.f32 %v59, %v102
    %104 = vmatmul.bf16.gmra.mxu0 %v86
    %v105 = vpop.f32.mrf.mxu0
    %v106 = vadd.f32 %v64, %v105
    %v107 = vpop.f32.mrf.mxu0
    %v108 = vadd.f32 %v69, %v107
    %109 = vdwg.mxu0
    %vm110 = vcmp.gt.f32.partialorder %v101, 0.0
    %vm111 = vcmp.gt.f32.partialorder %v103, 0.0
    %vm112 = vcmp.gt.f32.partialorder %v106, 0.0
    %vm113 = vcmp.gt.f32.partialorder %v108, 0.0
    %v114 = vmul.f32 %v101, 0.01
    %v115 = vmul.f32 %v103, 0.01
    %v116 = vmul.f32 %v106, 0.01
    %v117 = vmul.f32 %v108, 0.01
    %v118 = vsel %vm110, %v101, %v114
    %v119 = vsel %vm111, %v103, %v115
    %v120 = vsel %vm112, %v106, %v116
    %v121 = vsel %vm113, %v108, %v117
    %v122 = vld [vmem:[%s3] sm:$0xf]
    %v123 = vld [vmem:[%s3 + $0x4] sm:$0xf]
    %v124 = vld [vmem:[%s3 + $0x8] sm:$0xf]
    %v125 = vld [vmem:[%s3 + $0xc] sm:$0xf]
    %v126 = vld [vmem:[%s3 + $0x10] sm:$0xf]
    %v127 = vld [vmem:[%s3 + $0x14] sm:$0xf]
    %v128 = vld [vmem:[%s3 + $0x18] sm:$0xf]
    %v129 = vld [vmem:[%s3 + $0x1c] sm:$0xf]
    %v130 = vld [vmem:[%s3 + $0x20] sm:$0xf]
    %v131 = vld [vmem:[%s3 + $0x24] sm:$0xf]
    %v132 = vld [vmem:[%s3 + $0x28] sm:$0xf]
    %v133 = vld [vmem:[%s3 + $0x2c] sm:$0xf]
    %v134 = vpack.c.bf16 %v119, %v118
    %v135 = vpack.c.bf16 %v121, %v120
    %v136 = vld [vmem:[%s4] sm:$0xff]
    %v137 = vld [vmem:[%s4 + $0x8] sm:$0xff]
    %v138 = vld [vmem:[%s4 + $0x10] sm:$0xff]
    %v139 = vld [vmem:[%s4 + $0x18] sm:$0xff]
    %v140 = vld [vmem:[%s4 + $0x20] sm:$0xff]
    %v141 = vld [vmem:[%s4 + $0x28] sm:$0xff]
    %v142 = vld [vmem:[%s4 + $0x30] sm:$0xff]
    %v143 = vld [vmem:[%s4 + $0x38] sm:$0xff]
    %v144 = vld [vmem:[%s4 + $0x40] sm:$0xff]
    %v145 = vld [vmem:[%s4 + $0x48] sm:$0xff]
    %v146 = vld [vmem:[%s4 + $0x50] sm:$0xff]
    %v147 = vld [vmem:[%s4 + $0x58] sm:$0xff]
    %149 = vset.pattern.permute.xlu0 0
    %150 = vperm.xlu0 %149, %v136
    %v151 = vpop.permute.xlu0 %150
    %154 = vset.pattern.permute.xlu0 0
    %155 = vperm.xlu0 %154, %v137
    %v156 = vpop.permute.xlu0 %155
    %159 = vset.pattern.permute.xlu0 0
    %160 = vperm.xlu0 %159, %v138
    %v161 = vpop.permute.xlu0 %160
    %164 = vset.pattern.permute.xlu0 0
    %165 = vperm.xlu0 %164, %v139
    %v166 = vpop.permute.xlu0 %165
    %169 = vset.pattern.permute.xlu0 0
    %170 = vperm.xlu0 %169, %v140
    %v171 = vpop.permute.xlu0 %170
    %174 = vset.pattern.permute.xlu0 0
    %175 = vperm.xlu0 %174, %v141
    %v176 = vpop.permute.xlu0 %175
    %179 = vset.pattern.permute.xlu0 0
    %180 = vperm.xlu0 %179, %v142
    %v181 = vpop.permute.xlu0 %180
    %184 = vset.pattern.permute.xlu0 0
    %185 = vperm.xlu0 %184, %v143
    %v186 = vpop.permute.xlu0 %185
    %189 = vset.pattern.permute.xlu0 0
    %190 = vperm.xlu0 %189, %v144
    %v191 = vpop.permute.xlu0 %190
    %194 = vset.pattern.permute.xlu0 0
    %195 = vperm.xlu0 %194, %v145
    %v196 = vpop.permute.xlu0 %195
    %199 = vset.pattern.permute.xlu0 0
    %200 = vperm.xlu0 %199, %v146
    %v201 = vpop.permute.xlu0 %200
    %204 = vset.pattern.permute.xlu0 0
    %205 = vperm.xlu0 %204, %v147
    %v206 = vpop.permute.xlu0 %205
    %v220 = vunpack.c.l.b16 %v122
    %v221 = vunpack.c.l.b16 %v123
    %v222 = vunpack.c.l.b16 %v124
    %v223 = vunpack.c.l.b16 %v125
    %v224 = vunpack.c.l.b16 %v126
    %v225 = vunpack.c.l.b16 %v127
    %v226 = vunpack.c.l.b16 %v128
    %v227 = vunpack.c.l.b16 %v129
    %v228 = vunpack.c.l.b16 %v130
    %v229 = vunpack.c.l.b16 %v131
    %v230 = vunpack.c.l.b16 %v132
    %v231 = vunpack.c.l.b16 %v133
    %v232 = vpack.c.b16 %v221, %v220
    %v233 = vpack.c.b16 %v223, %v222
    %v234 = vpack.c.b16 %v225, %v224
    %v235 = vpack.c.b16 %v227, %v226
    %v236 = vpack.c.b16 %v229, %v228
    %v237 = vpack.c.b16 %v231, %v230
    %v239 = vsel %vm81, %v232, 0
    %v242 = vsel %vm81, %v233, 0
    %v245 = vsel %vm81, %v234, 0
    %v248 = vsel %vm81, %v235, 0
    %v251 = vsel %vm81, %v236, 0
    %v254 = vsel %vm81, %v237, 0
    %256 = vmatpush.bf16.msra.mxu0 0
    %257 = vmatpush.bf16.msra.mxu0 0
    %258 = vmatpush.bf16.msra.mxu0 0
    %259 = vmatpush.bf16.msra.mxu0 0
    %260 = vmatpush.bf16.msra.mxu0 0
    %261 = vmatpush.bf16.msra.mxu0 0
    %262 = vmatpush.bf16.msra.mxu0 %v135
    %263 = vmatpush.bf16.msra.mxu0 %v134
    %264 = vmatmul.bf16.gmra.mxu0 %v239
    %v265 = vpop.f32.mrf.mxu0
    %v266 = vadd.f32 %v151, %v265
    %v267 = vpop.f32.mrf.mxu0
    %v268 = vadd.f32 %v156, %v267
    %269 = vmatmul.bf16.gmra.mxu0 %v242
    %v270 = vpop.f32.mrf.mxu0
    %v271 = vadd.f32 %v161, %v270
    %v272 = vpop.f32.mrf.mxu0
    %v273 = vadd.f32 %v166, %v272
    %274 = vmatmul.bf16.gmra.mxu0 %v245
    %v275 = vpop.f32.mrf.mxu0
    %v276 = vadd.f32 %v171, %v275
    %v277 = vpop.f32.mrf.mxu0
    %v278 = vadd.f32 %v176, %v277
    %279 = vmatmul.bf16.gmra.mxu0 %v248
    %v280 = vpop.f32.mrf.mxu0
    %v281 = vadd.f32 %v181, %v280
    %v282 = vpop.f32.mrf.mxu0
    %v283 = vadd.f32 %v186, %v282
    %284 = vmatmul.bf16.gmra.mxu0 %v251
    %v285 = vpop.f32.mrf.mxu0
    %v286 = vadd.f32 %v191, %v285
    %v287 = vpop.f32.mrf.mxu0
    %v288 = vadd.f32 %v196, %v287
    %289 = vmatmul.bf16.gmra.mxu0 %v254
    %v290 = vpop.f32.mrf.mxu0
    %v291 = vadd.f32 %v201, %v290
    %v292 = vpop.f32.mrf.mxu0
    %v293 = vadd.f32 %v206, %v292
    %294 = vdwg.mxu0
    %vm295 = vcmp.gt.f32.partialorder %v266, 0.0
    %vm296 = vcmp.gt.f32.partialorder %v268, 0.0
    %vm297 = vcmp.gt.f32.partialorder %v271, 0.0
    %vm298 = vcmp.gt.f32.partialorder %v273, 0.0
    %vm299 = vcmp.gt.f32.partialorder %v276, 0.0
    %vm300 = vcmp.gt.f32.partialorder %v278, 0.0
    %vm301 = vcmp.gt.f32.partialorder %v281, 0.0
    %vm302 = vcmp.gt.f32.partialorder %v283, 0.0
    %vm303 = vcmp.gt.f32.partialorder %v286, 0.0
    %vm304 = vcmp.gt.f32.partialorder %v288, 0.0
    %vm305 = vcmp.gt.f32.partialorder %v291, 0.0
    %vm306 = vcmp.gt.f32.partialorder %v293, 0.0
    %v307 = vmul.f32 %v266, 0.01
    %v308 = vmul.f32 %v268, 0.01
    %v309 = vmul.f32 %v271, 0.01
    %v310 = vmul.f32 %v273, 0.01
    %v311 = vmul.f32 %v276, 0.01
    %v312 = vmul.f32 %v278, 0.01
    %v313 = vmul.f32 %v281, 0.01
    %v314 = vmul.f32 %v283, 0.01
    %v315 = vmul.f32 %v286, 0.01
    %v316 = vmul.f32 %v288, 0.01
    %v317 = vmul.f32 %v291, 0.01
    %v318 = vmul.f32 %v293, 0.01
    %v319 = vsel %vm295, %v266, %v307
    %v320 = vsel %vm296, %v268, %v308
    %v321 = vsel %vm297, %v271, %v309
    %v322 = vsel %vm298, %v273, %v310
    %v323 = vsel %vm299, %v276, %v311
    %v324 = vsel %vm300, %v278, %v312
    %v325 = vsel %vm301, %v281, %v313
    %v326 = vsel %vm302, %v283, %v314
    %v327 = vsel %vm303, %v286, %v315
    %v328 = vsel %vm304, %v288, %v316
    %v329 = vsel %vm305, %v291, %v317
    %v330 = vsel %vm306, %v293, %v318
    %v331 = vld [vmem:[%s5] sm:$0xf]
    %v332 = vld [vmem:[%s5 + $0x4] sm:$0xf]
    %v333 = vld [vmem:[%s5 + $0x8] sm:$0xf]
    %v334 = vld [vmem:[%s5 + $0xc] sm:$0xf]
    %v335 = vpack.c.bf16 %v320, %v319
    %v336 = vpack.c.bf16 %v322, %v321
    %v337 = vpack.c.bf16 %v324, %v323
    %v338 = vpack.c.bf16 %v326, %v325
    %v339 = vpack.c.bf16 %v328, %v327
    %v340 = vpack.c.bf16 %v330, %v329
    %v341 = vld [vmem:[%s6] sm:$0xff]
    %v342 = vld [vmem:[%s6 + $0x8] sm:$0xff]
    %v343 = vld [vmem:[%s6 + $0x10] sm:$0xff]
    %v344 = vld [vmem:[%s6 + $0x18] sm:$0xff]
    %346 = vset.pattern.permute.xlu0 0
    %347 = vperm.xlu0 %346, %v341
    %v348 = vpop.permute.xlu0 %347
    %351 = vset.pattern.permute.xlu0 0
    %352 = vperm.xlu0 %351, %v342
    %v353 = vpop.permute.xlu0 %352
    %356 = vset.pattern.permute.xlu0 0
    %357 = vperm.xlu0 %356, %v343
    %v358 = vpop.permute.xlu0 %357
    %361 = vset.pattern.permute.xlu0 0
    %362 = vperm.xlu0 %361, %v344
    %v363 = vpop.permute.xlu0 %362
    %v369 = vunpack.c.l.b16 %v331
    %v370 = vunpack.c.l.b16 %v332
    %v371 = vunpack.c.l.b16 %v333
    %v372 = vunpack.c.l.b16 %v334
    %v373 = vpack.c.b16 %v370, %v369
    %v374 = vpack.c.b16 %v372, %v371
    %vm375 = vcmask 785408
    %v377 = vsel %vm375, %v373, 0
    %v380 = vsel %vm375, %v374, 0
    %382 = vmatpush.bf16.msra.mxu0 0
    %383 = vmatpush.bf16.msra.mxu0 0
    %384 = vmatpush.bf16.msra.mxu0 %v340
    %385 = vmatpush.bf16.msra.mxu0 %v339
    %386 = vmatpush.bf16.msra.mxu0 %v338
    %387 = vmatpush.bf16.msra.mxu0 %v337
    %388 = vmatpush.bf16.msra.mxu0 %v336
    %389 = vmatpush.bf16.msra.mxu0 %v335
    %390 = vmatmul.bf16.gmra.mxu0 %v377
    %v391 = vpop.f32.mrf.mxu0
    %v392 = vadd.f32 %v348, %v391
    %v393 = vpop.f32.mrf.mxu0
    %v394 = vadd.f32 %v353, %v393
    %395 = vmatmul.bf16.gmra.mxu0 %v380
    %v396 = vpop.f32.mrf.mxu0
    %v397 = vadd.f32 %v358, %v396
    %v398 = vpop.f32.mrf.mxu0
    %v399 = vadd.f32 %v363, %v398
    %400 = vdwg.mxu0
    %vm401 = vcmp.gt.f32.partialorder %v392, 0.0
    %vm402 = vcmp.gt.f32.partialorder %v394, 0.0
    %vm403 = vcmp.gt.f32.partialorder %v397, 0.0
    %vm404 = vcmp.gt.f32.partialorder %v399, 0.0
    %v405 = vmul.f32 %v392, 0.01
    %v406 = vmul.f32 %v394, 0.01
    %v407 = vmul.f32 %v397, 0.01
    %v408 = vmul.f32 %v399, 0.01
    %v409 = vsel %vm401, %v392, %v405
    %v410 = vsel %vm402, %v394, %v406
    %v411 = vsel %vm403, %v397, %v407
    %v412 = vsel %vm404, %v399, %v408
    %v413 = vld [vmem:[%s7] sm:$0xf]
    %v414 = vld [vmem:[%s7 + $0x4] sm:$0xf]
    %v415 = vld [vmem:[%s7 + $0x8] sm:$0xf]
    %v416 = vld [vmem:[%s7 + $0xc] sm:$0xf]
    %v417 = vpack.c.bf16 %v410, %v409
    %v418 = vpack.c.bf16 %v412, %v411
    %v419 = vld [vmem:[%s8] sm:$0xff]
    %v420 = vld [vmem:[%s8 + $0x8] sm:$0xff]
    %v421 = vld [vmem:[%s8 + $0x10] sm:$0xff]
    %v422 = vld [vmem:[%s8 + $0x18] sm:$0xff]
    %424 = vset.pattern.permute.xlu0 0
    %425 = vperm.xlu0 %424, %v419
    %v426 = vpop.permute.xlu0 %425
    %429 = vset.pattern.permute.xlu0 0
    %430 = vperm.xlu0 %429, %v420
    %v431 = vpop.permute.xlu0 %430
    %434 = vset.pattern.permute.xlu0 0
    %435 = vperm.xlu0 %434, %v421
    %v436 = vpop.permute.xlu0 %435
    %439 = vset.pattern.permute.xlu0 0
    %440 = vperm.xlu0 %439, %v422
    %v441 = vpop.permute.xlu0 %440
    %v447 = vunpack.c.l.b16 %v413
    %v448 = vunpack.c.l.b16 %v414
    %v449 = vunpack.c.l.b16 %v415
    %v450 = vunpack.c.l.b16 %v416
    %v451 = vpack.c.b16 %v448, %v447
    %v452 = vpack.c.b16 %v450, %v449
    %v454 = vsel %vm81, %v451, 0
    %v457 = vsel %vm81, %v452, 0
    %459 = vmatpush.bf16.msra.mxu0 0
    %460 = vmatpush.bf16.msra.mxu0 0
    %461 = vmatpush.bf16.msra.mxu0 0
    %462 = vmatpush.bf16.msra.mxu0 0
    %463 = vmatpush.bf16.msra.mxu0 0
    %464 = vmatpush.bf16.msra.mxu0 0
    %465 = vmatpush.bf16.msra.mxu0 %v418
    %466 = vmatpush.bf16.msra.mxu0 %v417
    %467 = vmatmul.bf16.gmra.mxu0 %v454
    %v468 = vpop.f32.mrf.mxu0
    %v469 = vadd.f32 %v426, %v468
    %v470 = vpop.f32.mrf.mxu0
    %v471 = vadd.f32 %v431, %v470
    %472 = vmatmul.bf16.gmra.mxu0 %v457
    %v473 = vpop.f32.mrf.mxu0
    %v474 = vadd.f32 %v436, %v473
    %v475 = vpop.f32.mrf.mxu0
    %v476 = vadd.f32 %v441, %v475
    %477 = vdwg.mxu0
    %vm478 = vcmp.gt.f32.partialorder %v469, 0.0
    %vm479 = vcmp.gt.f32.partialorder %v471, 0.0
    %vm480 = vcmp.gt.f32.partialorder %v474, 0.0
    %vm481 = vcmp.gt.f32.partialorder %v476, 0.0
    %v482 = vmul.f32 %v469, 0.01
    %v483 = vmul.f32 %v471, 0.01
    %v484 = vmul.f32 %v474, 0.01
    %v485 = vmul.f32 %v476, 0.01
    %v486 = vsel %vm478, %v469, %v482
    %v487 = vsel %vm479, %v471, %v483
    %v488 = vsel %vm480, %v474, %v484
    %v489 = vsel %vm481, %v476, %v485
    %v490 = vld [vmem:[%s9] sm:$0x1]
    %v491 = vpack.c.bf16 %v487, %v486
    %v492 = vpack.c.bf16 %v489, %v488
    %v493 = vld [vmem:[#allocation2] sm:$0x1]
    %495 = vset.pattern.permute.xlu0 0
    %496 = vperm.xlu0 %495, %v493
    %v497 = vpop.permute.xlu0 %496
    %v499 = vperm.slane %v497, 0
    %v501 = vsel %vm81, %v490, 0
    %503 = vmatpush.bf16.msra.mxu0 0
    %504 = vmatpush.bf16.msra.mxu0 0
    %505 = vmatpush.bf16.msra.mxu0 0
    %506 = vmatpush.bf16.msra.mxu0 0
    %507 = vmatpush.bf16.msra.mxu0 0
    %508 = vmatpush.bf16.msra.mxu0 0
    %509 = vmatpush.bf16.msra.mxu0 %v492
    %510 = vmatpush.bf16.msra.mxu0 %v491
    %511 = vmatmul.bf16.gmra.mxu0 %v501
    %v512 = vpop.f32.mrf.mxu0
    %v513 = vadd.f32 %v499, %v512
    %v514 = vpop.f32.mrf.mxu0
    %515 = vdwg.mxu0
    %vm516 = vcmask 57344
    %517 = vst.msk [vmem:[#allocation3] sm:$0x1] %vm516, %v513
    // Predicated region
    $region46: #{tpu_custom_call.1} parent=1 // pred_check
      _
    $region47: #{tpu_custom_call.1} parent=1 // pred_check_branch
      %519 = sbr.rel (0) target = $region49
    $region48: #{tpu_custom_call.1} parent=1 // pred_region
      %521 = vsyncadd [#allocation4], 0
      %s523 = sshll.u32 [#allocation3], 4
      %s524 = int_to_ptr.vmem [resolvable:$true] %s523
      %s525 = sshll.u32 %s11, 4
      %s526 = int_to_ptr.hbm [resolvable:$true] %s525
      %528 = dma.vmem_to_hbm [thread:$0]  %s524, 16, %s526, [#allocation4]
    $region49: #{tpu_custom_call.1} parent=1 // pred_fallthru
      _
    // Predicated region
    $region50: #{tpu_custom_call.1} parent=1 // pred_check
      _
    $region51: #{tpu_custom_call.1} parent=1 // pred_check_branch
      %530 = sbr.rel (0) target = $region53
    $region52: #{tpu_custom_call.1} parent=1 // pred_region
      %532 = dma.done [#allocation4], 16
    $region53: #{tpu_custom_call.1} parent=1 // pred_fallthru
      _
    %533 = vsyncpa [#allocation4], 1

</llo_original>
